<compile_context>
chip_gen: v7x
topology: tpu7x:2x2x1
jax: 0.10.0
libtpu: 0.0.40
codegen_flags: <defaults>
</compile_context>

<pallas_src>
import jax
import jax.numpy as jnp
from jax.experimental import pallas as pl
from jax.experimental.pallas import tpu as pltpu


def _identity_copy_kernel(x_hbm, o_hbm, sem):
    """Whole-array identity: a single HBM->HBM DMA (no VMEM staging)."""
    copy = pltpu.make_async_copy(x_hbm, o_hbm, sem)
    copy.start()
    copy.wait()


def _make_chunked_copy_kernel(chunk: int):
    """Identity split into equal leading-axis chunks; one DMA per grid step."""

    def kernel(x_hbm, o_hbm, sem):
        i = pl.program_id(0)
        start = pl.multiple_of(i * chunk, chunk)
        copy = pltpu.make_async_copy(
            x_hbm.at[pl.ds(start, chunk)],
            o_hbm.at[pl.ds(start, chunk)],
            sem,
        )
        copy.start()
        copy.wait()

    return kernel


# Only split copies that are large enough for per-step overhead to matter;
# splitting lets both v7x TensorCores' DMA engines participate.
_CHUNK_SPLIT_MIN_BYTES = 8 * 1024 * 1024


@jax.jit
def base_model_forward(x: jax.Array) -> jax.Array:
    """Identity 'forward' of the abstract BaseModel as a Pallas HBM->HBM DMA."""
    if x.size == 0:
        return x  # nothing to copy

    hbm_spec = pl.BlockSpec(memory_space=pl.ANY)
    out_shape = jax.ShapeDtypeStruct(x.shape, x.dtype)

    nbytes = x.size * x.dtype.itemsize
    n_chunks = 1
    if x.ndim >= 1 and nbytes >= _CHUNK_SPLIT_MIN_BYTES:
        for c in (8, 4, 2):
            if x.shape[0] % c == 0:
                n_chunks = c
                break

    if n_chunks == 1:
        # Single full-array DMA: minimal fixed cost for small tensors.
        return pl.pallas_call(
            _identity_copy_kernel,
            out_shape=out_shape,
            in_specs=[hbm_spec],
            out_specs=hbm_spec,
            scratch_shapes=[pltpu.SemaphoreType.DMA],
        )(x)

    # A few large DMAs over a "parallel" grid: on v7x the grid shards across
    # both TensorCores so both DMA engines issue toward the HBM roofline.
    chunk = x.shape[0] // n_chunks
    return pl.pallas_call(
        _make_chunked_copy_kernel(chunk),
        out_shape=out_shape,
        grid=(n_chunks,),
        in_specs=[hbm_spec],
        out_specs=hbm_spec,
        scratch_shapes=[pltpu.SemaphoreType.DMA],
        compiler_params=pltpu.CompilerParams(
            dimension_semantics=("parallel",),
        ),
    )(x)


if __name__ == "__main__":
    key = jax.random.PRNGKey(0)
    # Small NCHW input consistent with a typical BaseModel subclass.
    x = jax.random.normal(key, (2, 4, 16, 16), dtype=jnp.float32)

    y = jax.block_until_ready(base_model_forward(x))
    assert y.shape == x.shape and y.dtype == x.dtype
    assert bool(jnp.all(y == x))

    # Also exercise the multi-chunk DMA path (dual-TC split on v7x) once.
    x_big = jax.random.normal(jax.random.PRNGKey(1), (2048, 1024), dtype=jnp.float32)
    y_big = jax.block_until_ready(base_model_forward(x_big))
    assert y_big.shape == x_big.shape and y_big.dtype == x_big.dtype
    assert bool(jnp.all(y_big == x_big))

    print("KERNEL_OK")
</pallas_src>

<mosaic_0001>
module attributes {stable_mosaic.version = 11 : i64} {
  func.func @_identity_copy_kernel(%arg0: memref<2x4x16x16xf32, #tpu.memory_space<any>>, %arg1: memref<2x4x16x16xf32, #tpu.memory_space<any>>, %arg2: memref<!tpu.dma_semaphore, #tpu.memory_space<semaphore_mem>>) attributes {dimension_semantics = [], scalar_prefetch = 0 : i64, scratch_operands = 1 : i64, tpu.core_type = #tpu.core_type<tc>} {
    tpu.enqueue_dma source(%arg0 : memref<2x4x16x16xf32, #tpu.memory_space<any>>) target(%arg1 : memref<2x4x16x16xf32, #tpu.memory_space<any>>) target_semaphore(%arg2 : memref<!tpu.dma_semaphore, #tpu.memory_space<semaphore_mem>>)
    tpu.wait_dma2 semaphore(%arg2 : memref<!tpu.dma_semaphore, #tpu.memory_space<semaphore_mem>>) src(%arg0 : memref<2x4x16x16xf32, #tpu.memory_space<any>>) dst(%arg1 : memref<2x4x16x16xf32, #tpu.memory_space<any>>)
    return
  }
}

</mosaic_0001>

<llo_original>
// kernel: base_model_forward.1
$region0: #{base_model_forward.1}
  #allocation0 [shape = 'u32[]', space=smem, size = 0x4, offset = 0x4, fixed_abs, tag = 'smem constant byte address 0x4 - core index']
  #allocation1 [shape = 'u32[144,128]{1,0:T(1,128)}', space=vmem, size = 0x12000, scoped, tag = 'internal scratch']
  #allocation2 [shape = 's32[1]{0}', space=sflag, size = 0x4, scoped, tag = 'scratch operand']
  #allocation3 [shape = 's32[]', space=sflag, size = 0x4, offset = 0, fixed_abs, tag = 'sflag constant byte address 0x0 - dummy sync flag']
  #allocation4 [shape = 'u32[0]{0}', space=smem, size = 0, offset = 0, fixed_abs, tag = 'smem constant byte address 0x0 - null']
  %s0 = inlined_call_operand.hbm [shape: f32[2,4,16,16], index: 0, kind: input, shape index: {}]
  %s1 = inlined_call_operand.hbm [shape: f32[2,4,16,16], index: 1, kind: output, shape index: {}]
  %s2 = sld [smem:[#allocation0]]
  $region2: #{base_model_forward.1} parent=0
    _
  %s4 = ssub.s32 1, %s2
  %s5 = scalar_select 0, %s4, %s2
  %s7 = sshll.u32 1, 14
  %s8 = sxor.u32 4294967295, %s7
  %s11 = sshll.u32 3, 24
  %s12 = sxor.u32 4294967295, %s11
  %s13 = sand.u32 0, %s12
  %s15 = sor.u32 %s13, 0
  %18 = dma.general %s0, 2048, %s1, [#allocation2], [#allocation3], [#allocation4], %s15, 0
  %s19 = smul.u32 2, 4
  %s20 = smul.u32 %s19, 16
  %s21 = smul.u32 %s20, 1
  %s22 = sshll.u32 %s21, 4
  %23 = dma.done [#allocation2], %s22
  %24 = vsyncmov [#allocation2]
  %s25 = vpop.sfrf %24
  %p26 = scmp.eq.s32.totalorder %s25, 0
  %p27 = pneg %p26
  %29 = shalt.err (%p27)

</llo_original>
